<compile_context>
chip_gen: v7x
topology: tpu7x:2x2x1
jax: 0.10.0
libtpu: 0.0.40
codegen_flags: <defaults>
</compile_context>

<pallas_src>
import jax
import jax.numpy as jnp
from jax import lax
from jax.experimental import pallas as pl
from jax.experimental.pallas import tpu as pltpu

EPS = 1e-5


def resblock_stack_kernel(x_ref, w_ref, b_ref, gamma_ref, beta_ref, o_ref):
    """One grid step == one ResBlock layer; o_ref carries the activation."""
    l = pl.program_id(0)

    # Seed the resident activation with the kernel input on the first layer.
    @pl.when(l == 0)
    def _():
        o_ref[...] = x_ref[...]

    x = o_ref[...]                                            # (B, F) activation carry

    # Linear: MXU matmul + bias.  (f32 inputs; bf16 cast is a scale-up option.)
    y = jnp.dot(x, w_ref[0], preferred_element_type=jnp.float32) + b_ref[0]

    # BatchNorm1d (training mode): per-feature stats over the batch axis.
    mean = jnp.mean(y, axis=0, keepdims=True)                 # (1, F)
    centered = y - mean
    var = jnp.mean(centered * centered, axis=0, keepdims=True)
    y = centered * lax.rsqrt(var + EPS)
    y = y * gamma_ref[0] + beta_ref[0]

    # ReLU + residual; stays resident in VMEM, written to HBM after last layer.
    o_ref[...] = x + jnp.maximum(y, 0.0)


def resblock_stack_forward(x, w, b, gamma, beta):
    """Apply L stacked ResBlocks in a single pallas_call.

    x:              (B, F) float32
    w:              (L, F, F) float32   (stored as (in, out) per layer)
    b, gamma, beta: (L, 1, F) float32
    """
    B, F = x.shape
    L = w.shape[0]
    return pl.pallas_call(
        resblock_stack_kernel,
        out_shape=jax.ShapeDtypeStruct((B, F), jnp.float32),
        grid=(L,),
        in_specs=[
            pl.BlockSpec((B, F), lambda l: (0, 0)),        # activation input (resident)
            pl.BlockSpec((1, F, F), lambda l: (l, 0, 0)),  # per-layer weight (streamed)
            pl.BlockSpec((1, 1, F), lambda l: (l, 0, 0)),  # per-layer bias
            pl.BlockSpec((1, 1, F), lambda l: (l, 0, 0)),  # per-layer BN gamma
            pl.BlockSpec((1, 1, F), lambda l: (l, 0, 0)),  # per-layer BN beta
        ],
        # Same output block every step => resident accumulator across the layer
        # axis; HBM writeback happens once at the end.
        out_specs=pl.BlockSpec((B, F), lambda l: (0, 0)),
        compiler_params=pltpu.CompilerParams(
            dimension_semantics=("arbitrary",),            # sequential layer carry
        ),
    )(x, w, b, gamma, beta)


def resblock_stack_reference(x, w, b, gamma, beta):
    """Pure-JAX reference: L sequential PyTorch-style ResBlocks."""
    out = x
    for l in range(w.shape[0]):
        y = out @ w[l] + b[l]
        mean = jnp.mean(y, axis=0, keepdims=True)
        var = jnp.mean((y - mean) ** 2, axis=0, keepdims=True)
        y = (y - mean) / jnp.sqrt(var + EPS) * gamma[l] + beta[l]
        out = out + jnp.maximum(y, 0.0)
    return out


if __name__ == "__main__":
    B, F, L = 8, 256, 4   # batch=8, features = module default shape=256, 4 fused layers

    key = jax.random.PRNGKey(0)
    kx, kw, kb = jax.random.split(key, 3)

    x = jax.random.normal(kx, (B, F), dtype=jnp.float32)
    # Deterministic "Linear" params (kaiming-ish scale), stored as (L, in, out).
    w = jax.random.normal(kw, (L, F, F), dtype=jnp.float32) / jnp.sqrt(F)
    b = jax.random.normal(kb, (L, 1, F), dtype=jnp.float32) * 0.01
    # BatchNorm1d default init: gamma=1, beta=0.
    gamma = jnp.ones((L, 1, F), dtype=jnp.float32)
    beta = jnp.zeros((L, 1, F), dtype=jnp.float32)

    out = resblock_stack_forward(x, w, b, gamma, beta)
    out = jax.block_until_ready(out)

    ref = resblock_stack_reference(x, w, b, gamma, beta)
    assert out.shape == (B, F)
    assert jnp.allclose(out, ref, atol=1e-3, rtol=1e-3)

    # TODO(synk): training-mode BatchNorm1d also updates running_mean/running_var
    # as a side effect; not materialized here (does not affect the forward output).

    print("KERNEL_OK")
</pallas_src>

<mosaic_0001>
module attributes {stable_mosaic.version = 11 : i64} {
  func.func @resblock_stack_kernel(%arg0: i32, %arg1: memref<8x256xf32, #tpu.memory_space<vmem>>, %arg2: memref<1x256x256xf32, #tpu.memory_space<vmem>>, %arg3: memref<1x1x256xf32, #tpu.memory_space<vmem>>, %arg4: memref<1x1x256xf32, #tpu.memory_space<vmem>>, %arg5: memref<1x1x256xf32, #tpu.memory_space<vmem>>, %arg6: memref<8x256xf32, #tpu.memory_space<vmem>>) attributes {dimension_semantics = [#tpu.dimension_semantics<arbitrary>], iteration_bounds = array<i64: 4>, scalar_prefetch = 0 : i64, scratch_operands = 0 : i64, tpu.core_type = #tpu.core_type<tc>, window_params = [{pipeline_mode = #tpu.pipeline_mode<synchronous>, transform_indices = @transform_0, window_bounds = array<i64: 8, 256>}, {transform_indices = @transform_1, window_bounds = array<i64: 1, 256, 256>}, {transform_indices = @transform_2, window_bounds = array<i64: 1, 1, 256>}, {transform_indices = @transform_3, window_bounds = array<i64: 1, 1, 256>}, {transform_indices = @transform_4, window_bounds = array<i64: 1, 1, 256>}, {pipeline_mode = #tpu.pipeline_mode<synchronous>, transform_indices = @transform_5, window_bounds = array<i64: 8, 256>}]} {
    %c0_i32 = arith.constant 0 : i32
    %0 = arith.cmpi eq, %arg0, %c0_i32 : i32
    %1 = arith.extui %0 : i1 to i32
    %c0_i32_0 = arith.constant 0 : i32
    %2 = arith.cmpi ne, %1, %c0_i32_0 : i32
    scf.if %2 {
      %c0_22 = arith.constant 0 : index
      %c0_23 = arith.constant 0 : index
      %39 = vector.load %arg1[%c0_22, %c0_23] : memref<8x256xf32, #tpu.memory_space<vmem>>, vector<8x256xf32>
      %c0_24 = arith.constant 0 : index
      %c0_25 = arith.constant 0 : index
      %40 = vector.load %arg6[%c0_24, %c0_25] : memref<8x256xf32, #tpu.memory_space<vmem>>, vector<8x256xf32>
      tpu.vector_store %arg6[%c0_24, %c0_25], %39 {strides = array<i32>} : memref<8x256xf32, #tpu.memory_space<vmem>>, vector<8x256xf32>,
    } else {
    }
    %c0 = arith.constant 0 : index
    %c0_1 = arith.constant 0 : index
    %3 = vector.load %arg6[%c0, %c0_1] : memref<8x256xf32, #tpu.memory_space<vmem>>, vector<8x256xf32>
    %c0_2 = arith.constant 0 : index
    %c0_3 = arith.constant 0 : index
    %c0_4 = arith.constant 0 : index
    %4 = vector.load %arg2[%c0_2, %c0_3, %c0_4] : memref<1x256x256xf32, #tpu.memory_space<vmem>>, vector<1x256x256xf32>
    %5 = vector.shape_cast %4 : vector<1x256x256xf32> to vector<256x256xf32>
    %cst = arith.constant dense<0.000000e+00> : vector<8x256xf32>
    %6 = tpu.matmul %3, %5, %cst {dimension_numbers = #tpu.dot_dimension_numbers<[1], [0], [0], [1], [0, 0, 1, 1], [], []>} : vector<8x256xf32>, vector<256x256xf32>, vector<8x256xf32> -> vector<8x256xf32>
    %c0_5 = arith.constant 0 : index
    %c0_6 = arith.constant 0 : index
    %c0_7 = arith.constant 0 : index
    %7 = vector.load %arg3[%c0_5, %c0_6, %c0_7] : memref<1x1x256xf32, #tpu.memory_space<vmem>>, vector<1x1x256xf32>
    %8 = vector.shape_cast %7 : vector<1x1x256xf32> to vector<1x256xf32>
    %9 = vector.broadcast %8 : vector<1x256xf32> to vector<8x256xf32>
    %10 = arith.addf %6, %9 : vector<8x256xf32>
    %cst_8 = arith.constant dense<0.000000e+00> : vector<256xf32>
    %11 = vector.multi_reduction <add>, %10, %cst_8 [0] : vector<8x256xf32> to vector<256xf32>
    %12 = vector.shape_cast %11 : vector<256xf32> to vector<1x256xf32>
    %cst_9 = arith.constant 8.000000e+00 : f32
    %13 = vector.broadcast %cst_9 : f32 to vector<1x256xf32>
    %14 = arith.divf %12, %13 : vector<1x256xf32>
    %15 = vector.broadcast %14 : vector<1x256xf32> to vector<8x256xf32>
    %16 = arith.subf %10, %15 : vector<8x256xf32>
    %17 = arith.mulf %16, %16 : vector<8x256xf32>
    %cst_10 = arith.constant dense<0.000000e+00> : vector<256xf32>
    %18 = vector.multi_reduction <add>, %17, %cst_10 [0] : vector<8x256xf32> to vector<256xf32>
    %19 = vector.shape_cast %18 : vector<256xf32> to vector<1x256xf32>
    %cst_11 = arith.constant 8.000000e+00 : f32
    %20 = vector.broadcast %cst_11 : f32 to vector<1x256xf32>
    %21 = arith.divf %19, %20 : vector<1x256xf32>
    %cst_12 = arith.constant 9.99999974E-6 : f32
    %22 = vector.broadcast %cst_12 : f32 to vector<1x256xf32>
    %23 = arith.addf %21, %22 : vector<1x256xf32>
    %24 = math.rsqrt %23 : vector<1x256xf32>
    %25 = vector.broadcast %24 : vector<1x256xf32> to vector<8x256xf32>
    %26 = arith.mulf %16, %25 : vector<8x256xf32>
    %c0_13 = arith.constant 0 : index
    %c0_14 = arith.constant 0 : index
    %c0_15 = arith.constant 0 : index
    %27 = vector.load %arg4[%c0_13, %c0_14, %c0_15] : memref<1x1x256xf32, #tpu.memory_space<vmem>>, vector<1x1x256xf32>
    %28 = vector.shape_cast %27 : vector<1x1x256xf32> to vector<1x256xf32>
    %29 = vector.broadcast %28 : vector<1x256xf32> to vector<8x256xf32>
    %30 = arith.mulf %26, %29 : vector<8x256xf32>
    %c0_16 = arith.constant 0 : index
    %c0_17 = arith.constant 0 : index
    %c0_18 = arith.constant 0 : index
    %31 = vector.load %arg5[%c0_16, %c0_17, %c0_18] : memref<1x1x256xf32, #tpu.memory_space<vmem>>, vector<1x1x256xf32>
    %32 = vector.shape_cast %31 : vector<1x1x256xf32> to vector<1x256xf32>
    %33 = vector.broadcast %32 : vector<1x256xf32> to vector<8x256xf32>
    %34 = arith.addf %30, %33 : vector<8x256xf32>
    %cst_19 = arith.constant 0.000000e+00 : f32
    %35 = vector.broadcast %cst_19 : f32 to vector<8x256xf32>
    %36 = arith.maximumf %34, %35 : vector<8x256xf32>
    %37 = arith.addf %3, %36 : vector<8x256xf32>
    %c0_20 = arith.constant 0 : index
    %c0_21 = arith.constant 0 : index
    %38 = vector.load %arg6[%c0_20, %c0_21] : memref<8x256xf32, #tpu.memory_space<vmem>>, vector<8x256xf32>
    tpu.vector_store %arg6[%c0_20, %c0_21], %37 {strides = array<i32>} : memref<8x256xf32, #tpu.memory_space<vmem>>, vector<8x256xf32>,
    return
  }
  func.func @transform_0(%arg0: i32) -> (i32, i32) {
    %c0_i32 = arith.constant 0 : i32
    %c0_i32_0 = arith.constant 0 : i32
    %c0_i32_1 = arith.constant 0 : i32
    return %c0_i32, %c0_i32_0 : i32, i32
  }
  func.func @transform_1(%arg0: i32) -> (i32, i32, i32) {
    %c0_i32 = arith.constant 0 : i32
    %c0_i32_0 = arith.constant 0 : i32
    %c0_i32_1 = arith.constant 0 : i32
    return %arg0, %c0_i32, %c0_i32_0 : i32, i32, i32
  }
  func.func @transform_2(%arg0: i32) -> (i32, i32, i32) {
    %c0_i32 = arith.constant 0 : i32
    %c0_i32_0 = arith.constant 0 : i32
    %c0_i32_1 = arith.constant 0 : i32
    return %arg0, %c0_i32, %c0_i32_0 : i32, i32, i32
  }
  func.func @transform_3(%arg0: i32) -> (i32, i32, i32) {
    %c0_i32 = arith.constant 0 : i32
    %c0_i32_0 = arith.constant 0 : i32
    %c0_i32_1 = arith.constant 0 : i32
    return %arg0, %c0_i32, %c0_i32_0 : i32, i32, i32
  }
  func.func @transform_4(%arg0: i32) -> (i32, i32, i32) {
    %c0_i32 = arith.constant 0 : i32
    %c0_i32_0 = arith.constant 0 : i32
    %c0_i32_1 = arith.constant 0 : i32
    return %arg0, %c0_i32, %c0_i32_0 : i32, i32, i32
  }
  func.func @transform_5(%arg0: i32) -> (i32, i32) {
    %c0_i32 = arith.constant 0 : i32
    %c0_i32_0 = arith.constant 0 : i32
    %c0_i32_1 = arith.constant 0 : i32
    return %c0_i32, %c0_i32_0 : i32, i32
  }
}

</mosaic_0001>

<llo_original>
// kernel: tpu_custom_call.1
$region0: #{tpu_custom_call.1}
  #allocation0 [shape = 'u32[]', space=smem, size = 0x4, offset = 0x4, fixed_abs, tag = 'smem constant byte address 0x4 - core index']
  #allocation1 [shape = 'u32[144,128]{1,0:T(1,128)}', space=vmem, size = 0x12000, scoped, tag = 'internal scratch']
  %s0 = inlined_call_operand.hbm [shape: f32[8,256], index: 0, kind: input, shape index: {}]
  %s1 = inlined_call_operand.hbm [shape: f32[4,256,256], index: 1, kind: input, shape index: {}]
  %s2 = inlined_call_operand.hbm [shape: f32[4,1,256], index: 2, kind: input, shape index: {}]
  %s3 = inlined_call_operand.vmem [shape: f32[4,1,256], index: 3, kind: input, shape index: {}]
  %s4 = inlined_call_operand.hbm [shape: f32[4,1,256], index: 4, kind: input, shape index: {}]
  %s5 = inlined_call_operand.hbm [shape: f32[8,256], index: 5, kind: output, shape index: {}]
  %s6 = sld [smem:[#allocation0]]
  $region73: #{tpu_custom_call.1} parent=0
    _
  %s8 = ssub.s32 1, %s6
  %s9 = scalar_select 0, %s8, %s6
  $region1: #{tpu_custom_call.1} parent=0
    #allocation2 [shape = 'u8[8192]{0}', space=vmem, size = 0x2000, scoped, tag = 'input window, operand 0, single buffered']
    #allocation3 [shape = 's32[2]{0}', space=sflag, size = 0x8, scoped, tag = 'scoped memory for tpu_custom_call.1']
    #allocation4 [shape = 's32[2]{0}', space=sflag, size = 0x8, scoped, tag = 'scoped memory for tpu_custom_call.1']
    #allocation5 [shape = 'u8[524288]{0}', space=vmem, size = 0x80000, scoped, tag = 'input window, operand 1']
    #allocation6 [shape = 's32[2]{0}', space=sflag, size = 0x8, scoped, tag = 'scoped memory for tpu_custom_call.1']
    #allocation7 [shape = 'u8[2048]{0}', space=vmem, size = 0x800, scoped, tag = 'input window, operand 2']
    #allocation8 [shape = 'u8[2048]{0}', space=vmem, size = 0x800, scoped, tag = 'input window, operand 4']
    #allocation9 [shape = 's32[2]{0}', space=sflag, size = 0x8, scoped, tag = 'scoped memory for tpu_custom_call.1']
    #allocation10 [shape = 'u8[8192]{0}', space=vmem, size = 0x2000, scoped, tag = 'output window, operand 0, single buffered']
    %10 = vsyncpa [#allocation3], 0
    %11 = vsyncpa [#allocation6], 0
    %s12 = scalar_lea.sflag [#allocation6], 1
    %13 = vsyncpa %s12, 0
    %14 = vsyncpa [#allocation9], 0
    %s15 = scalar_lea.sflag [#allocation9], 1
    %16 = vsyncpa %s15, 0
    %17 = vsyncpa [#allocation4], 0
    loop: start=0, step=1, limit=6
    $region2: #{tpu_custom_call.1} parent=1 // loop_pre_header
      _
    $region3: #{tpu_custom_call.1} parent=1 // loop_header
      %s19 = sphi 0, %s23
      %p20 = scmp.ge.s32.totalorder %s19, 6
      %s27 = sphi 0, %s27
      %s29 = sphi 0, %s27
      %s30 = sphi 0, %s29
      %s44 = sphi 0, %s30
      %s50 = sphi 0, %s52
      %s53 = sphi 0, %s50
      %s54 = sphi 0, %s53
      %s70 = sphi 0, %s54
      %s76 = sphi 0, %s78
      %s79 = sphi 0, %s76
      %s80 = sphi 0, %s79
      %s96 = sphi 0, %s80
      %s102 = sphi 0, %s104
      %s105 = sphi 0, %s102
      %s106 = sphi 0, %s105
      %s122 = sphi 0, %s106
      %s128 = sphi 0, %s130
      %s131 = sphi 0, %s128
      %s132 = sphi 0, %s131
      %s148 = sphi 0, %s132
      %s152 = sphi 0, %s152
      %s154 = sphi 0, %s152
      %s155 = sphi 0, %s154
      %s169 = sphi 0, %s155
    $region4: #{tpu_custom_call.1} parent=1 // loop_header_branch
      %22 = sbr.rel (%p20) target = $region8
    $region5: #{tpu_custom_call.1} parent=1 // loop_body
      %s24 = ssub.s32 %s19, 1
      %s25 = ssub.s32 %s19, 2
      %s26 = sadd.s32 %s19, 1
      %s28 = sadd.s32 %s27, 1
      %p31 = scmp.eq.s32.totalorder %s19, 3
      %p32 = scmp.ne.s32.totalorder %s27, %s29
      %p33 = scmp.eq.s32.totalorder %s19, 0
      %p34 = por %p32, %p33
      %p35 = scmp.ne.s32.totalorder %s27, %s29
      %p36 = scmp.eq.s32.totalorder %s24, 3
      %p37 = por %p35, %p36
      %p38 = scmp.ne.s32.totalorder %s29, %s30
      %p39 = scmp.eq.s32.totalorder %s24, 0
      %p40 = por %p38, %p39
      %p41 = scmp.ne.s32.totalorder %s29, %s30
      %p42 = scmp.eq.s32.totalorder %s25, 3
      %p43 = por %p41, %p42
      %p45 = scmp.ne.s32.totalorder %s30, %s44
      %p46 = scmp.eq.s32.totalorder %s25, 0
      %p47 = por %p45, %p46
      %s48 = ssub.s32 %s19, %s26
      %p49 = scmp.eq.s32.totalorder %s48, 0
      %s51 = sadd.s32 %s50, 1
      %s52 = scalar_select %p49, %s50, %s51
      %p55 = pneg %p49
      %p56 = scmp.eq.s32.totalorder %s19, 3
      %p57 = por %p55, %p56
      %p58 = scmp.ne.s32.totalorder %s50, %s53
      %p59 = scmp.eq.s32.totalorder %s19, 0
      %p60 = por %p58, %p59
      %p61 = scmp.ne.s32.totalorder %s50, %s53
      %p62 = scmp.eq.s32.totalorder %s24, 3
      %p63 = por %p61, %p62
      %p64 = scmp.ne.s32.totalorder %s53, %s54
      %p65 = scmp.eq.s32.totalorder %s24, 0
      %p66 = por %p64, %p65
      %p67 = scmp.ne.s32.totalorder %s53, %s54
      %p68 = scmp.eq.s32.totalorder %s25, 3
      %p69 = por %p67, %p68
      %p71 = scmp.ne.s32.totalorder %s54, %s70
      %p72 = scmp.eq.s32.totalorder %s25, 0
      %p73 = por %p71, %p72
      %s74 = ssub.s32 %s19, %s26
      %p75 = scmp.eq.s32.totalorder %s74, 0
      %s77 = sadd.s32 %s76, 1
      %s78 = scalar_select %p75, %s76, %s77
      %p81 = pneg %p75
      %p82 = scmp.eq.s32.totalorder %s19, 3
      %p83 = por %p81, %p82
      %p84 = scmp.ne.s32.totalorder %s76, %s79
      %p85 = scmp.eq.s32.totalorder %s19, 0
      %p86 = por %p84, %p85
      %p87 = scmp.ne.s32.totalorder %s76, %s79
      %p88 = scmp.eq.s32.totalorder %s24, 3
      %p89 = por %p87, %p88
      %p90 = scmp.ne.s32.totalorder %s79, %s80
      %p91 = scmp.eq.s32.totalorder %s24, 0
      %p92 = por %p90, %p91
      %p93 = scmp.ne.s32.totalorder %s79, %s80
      %p94 = scmp.eq.s32.totalorder %s25, 3
      %p95 = por %p93, %p94
      %p97 = scmp.ne.s32.totalorder %s80, %s96
      %p98 = scmp.eq.s32.totalorder %s25, 0
      %p99 = por %p97, %p98
      %s100 = ssub.s32 %s19, %s26
      %p101 = scmp.eq.s32.totalorder %s100, 0
      %s103 = sadd.s32 %s102, 1
      %s104 = scalar_select %p101, %s102, %s103
      %p107 = pneg %p101
      %p108 = scmp.eq.s32.totalorder %s19, 3
      %p109 = por %p107, %p108
      %p110 = scmp.ne.s32.totalorder %s102, %s105
      %p111 = scmp.eq.s32.totalorder %s19, 0
      %p112 = por %p110, %p111
      %p113 = scmp.ne.s32.totalorder %s102, %s105
      %p114 = scmp.eq.s32.totalorder %s24, 3
      %p115 = por %p113, %p114
      %p116 = scmp.ne.s32.totalorder %s105, %s106
      %p117 = scmp.eq.s32.totalorder %s24, 0
      %p118 = por %p116, %p117
      %p119 = scmp.ne.s32.totalorder %s105, %s106
      %p120 = scmp.eq.s32.totalorder %s25, 3
      %p121 = por %p119, %p120
      %p123 = scmp.ne.s32.totalorder %s106, %s122
      %p124 = scmp.eq.s32.totalorder %s25, 0
      %p125 = por %p123, %p124
      %s126 = ssub.s32 %s19, %s26
      %p127 = scmp.eq.s32.totalorder %s126, 0
      %s129 = sadd.s32 %s128, 1
      %s130 = scalar_select %p127, %s128, %s129
      %p133 = pneg %p127
      %p134 = scmp.eq.s32.totalorder %s19, 3
      %p135 = por %p133, %p134
      %p136 = scmp.ne.s32.totalorder %s128, %s131
      %p137 = scmp.eq.s32.totalorder %s19, 0
      %p138 = por %p136, %p137
      %p139 = scmp.ne.s32.totalorder %s128, %s131
      %p140 = scmp.eq.s32.totalorder %s24, 3
      %p141 = por %p139, %p140
      %p142 = scmp.ne.s32.totalorder %s131, %s132
      %p143 = scmp.eq.s32.totalorder %s24, 0
      %p144 = por %p142, %p143
      %p145 = scmp.ne.s32.totalorder %s131, %s132
      %p146 = scmp.eq.s32.totalorder %s25, 3
      %p147 = por %p145, %p146
      %p149 = scmp.ne.s32.totalorder %s132, %s148
      %p150 = scmp.eq.s32.totalorder %s25, 0
      %p151 = por %p149, %p150
      %s153 = sadd.s32 %s152, 1
      %p156 = scmp.eq.s32.totalorder %s19, 3
      %p157 = scmp.ne.s32.totalorder %s152, %s154
      %p158 = scmp.eq.s32.totalorder %s19, 0
      %p159 = por %p157, %p158
      %p160 = scmp.ne.s32.totalorder %s152, %s154
      %p161 = scmp.eq.s32.totalorder %s24, 3
      %p162 = por %p160, %p161
      %p163 = scmp.ne.s32.totalorder %s154, %s155
      %p164 = scmp.eq.s32.totalorder %s24, 0
      %p165 = por %p163, %p164
      %p166 = scmp.ne.s32.totalorder %s154, %s155
      %p167 = scmp.eq.s32.totalorder %s25, 3
      %p168 = por %p166, %p167
      %p170 = scmp.ne.s32.totalorder %s155, %s169
      %p171 = scmp.eq.s32.totalorder %s25, 0
      %p172 = por %p170, %p171
      %p173 = scmp.le.s32.totalorder 1, %s19
      %p174 = scmp.lt.s32.totalorder %s19, 5
      %p175 = pnand %p173, %p174
      %p176 = pneg %p175
      // Predicated region
      $region9: #{tpu_custom_call.1} parent=5 // pred_check
        _
      $region10: #{tpu_custom_call.1} parent=5 // pred_check_branch
        %178 = sbr.rel (%p175) target = $region12
      $region11: #{tpu_custom_call.1} parent=5 // pred_region
        %s179 = ssub.s32 %s19, 1
        // Predicated region
        $region13: #{tpu_custom_call.1} parent=11 // pred_check
          %p180 = pneg %p40
        $region14: #{tpu_custom_call.1} parent=11 // pred_check_branch
          %182 = sbr.rel (%p180) target = $region16
        $region15: #{tpu_custom_call.1} parent=11 // pred_region
          %s184 = ssub.s32 256, 256
          %185 = vsyncadd [#allocation3], %s184
          %s187 = sshll.u32 [#allocation2], 4
          %s188 = int_to_ptr.vmem [resolvable:$true] %s187
          %190 = dma.hbm_to_vmem [thread:$0]  %s0, 256, %s188, [#allocation3]
        $region16: #{tpu_custom_call.1} parent=11 // pred_fallthru
          _
      $region12: #{tpu_custom_call.1} parent=5 // pred_fallthru
        _
      %p191 = scmp.lt.s32.totalorder %s19, 4
      // Predicated region
      $region17: #{tpu_custom_call.1} parent=5 // pred_check
        %p192 = pneg %p191
      $region18: #{tpu_custom_call.1} parent=5 // pred_check_branch
        %194 = sbr.rel (%p192) target = $region20
      $region19: #{tpu_custom_call.1} parent=5 // pred_region
        // Predicated region
        $region21: #{tpu_custom_call.1} parent=19 // pred_check
          %p195 = pneg %p60
        $region22: #{tpu_custom_call.1} parent=19 // pred_check_branch
          %197 = sbr.rel (%p195) target = $region24
        $region23: #{tpu_custom_call.1} parent=19 // pred_region
          %s198 = sand.u32 %s19, 1
          %s199 = scalar_lea.sflag [#allocation6], %s198
          %s200 = sand.u32 %s50, 1
          %s201 = smul.addr %s200, 512
          %s202 = scalar_lea.vmem [#allocation5], %s201
          %s204 = ssub.s32 8192, 8192
          %205 = vsyncadd %s199, %s204
          %s206 = smul.addr %s19, 64
          %s207 = smul.addr %s206, 128
          %s208 = scalar_lea.hbm %s1, %s207
          %s209 = sshll.u32 %s202, 4
          %s210 = int_to_ptr.vmem [resolvable:$true] %s209
          %215 = dma.hbm_to_vmem [thread:$0]  %s208, 8192, %s210, %s199, 256, 256, 16
        $region24: #{tpu_custom_call.1} parent=19 // pred_fallthru
          _
        // Predicated region
        $region25: #{tpu_custom_call.1} parent=19 // pred_check
          %p216 = pneg %p86
        $region26: #{tpu_custom_call.1} parent=19 // pred_check_branch
          %218 = sbr.rel (%p216) target = $region28
        $region27: #{tpu_custom_call.1} parent=19 // pred_region
          %s219 = sand.u32 %s19, 1
          %s220 = scalar_lea.sflag [#allocation6], %s219
          %s221 = sand.u32 %s76, 1
          %s222 = smul.addr %s221, 2
          %s223 = scalar_lea.vmem [#allocation7], %s222
          %s225 = ssub.s32 32, 32
          %226 = vsyncadd %s220, %s225
          %s227 = smul.addr %s19, 2
          %s228 = smul.addr %s227, 16
          %s229 = scalar_lea.hbm %s2, %s228
          %s231 = sshll.u32 %s223, 4
          %s232 = int_to_ptr.vmem [resolvable:$true] %s231
          %234 = dma.hbm_to_vmem [thread:$0]  %s229, 32, %s232, %s220
        $region28: #{tpu_custom_call.1} parent=19 // pred_fallthru
          _
        // Predicated region
        $region29: #{tpu_custom_call.1} parent=19 // pred_check
          %p235 = pneg %p112
        $region30: #{tpu_custom_call.1} parent=19 // pred_check_branch
          %237 = sbr.rel (%p235) target = $region32
        $region31: #{tpu_custom_call.1} parent=19 // pred_region
          %p238 = scmp.lt.s32.totalorder %s19, 3
          %s239 = scalar_select %p238, %s19, 3
          %s240 = smul.addr %s239, 2
          %s241 = scalar_lea.vmem %s3, %s240
        $region32: #{tpu_custom_call.1} parent=19 // pred_fallthru
          _
        // Predicated region
        $region33: #{tpu_custom_call.1} parent=19 // pred_check
          %p242 = pneg %p138
        $region34: #{tpu_custom_call.1} parent=19 // pred_check_branch
          %244 = sbr.rel (%p242) target = $region36
        $region35: #{tpu_custom_call.1} parent=19 // pred_region
          %s245 = sand.u32 %s128, 1
          %s246 = scalar_lea.sflag [#allocation9], %s245
          %s247 = sand.u32 %s128, 1
          %s248 = smul.addr %s247, 2
          %s249 = scalar_lea.vmem [#allocation8], %s248
          %s251 = ssub.s32 32, 32
          %252 = vsyncadd %s246, %s251
          %s253 = smul.addr %s19, 2
          %s254 = smul.addr %s253, 16
          %s255 = scalar_lea.hbm %s4, %s254
          %s257 = sshll.u32 %s249, 4
          %s258 = int_to_ptr.vmem [resolvable:$true] %s257
          %260 = dma.hbm_to_vmem [thread:$0]  %s255, 32, %s258, %s246
        $region36: #{tpu_custom_call.1} parent=19 // pred_fallthru
          _
      $region20: #{tpu_custom_call.1} parent=5 // pred_fallthru
        _
      %p261 = scmp.le.s32.totalorder 1, %s19
      %p262 = scmp.lt.s32.totalorder %s19, 5
      %p263 = pnand %p261, %p262
      %p264 = pneg %p263
      // Predicated region
      $region37: #{tpu_custom_call.1} parent=5 // pred_check
        _
      $region38: #{tpu_custom_call.1} parent=5 // pred_check_branch
        %266 = sbr.rel (%p263) target = $region40
      $region39: #{tpu_custom_call.1} parent=5 // pred_region
        %s267 = ssub.s32 %s19, 1
        // Predicated region
        $region41: #{tpu_custom_call.1} parent=39 // pred_check
          %p268 = pneg %p40
        $region42: #{tpu_custom_call.1} parent=39 // pred_check_branch
          %270 = sbr.rel (%p268) target = $region44
        $region43: #{tpu_custom_call.1} parent=39 // pred_region
          %271 = dma.done [#allocation3], 256
        $region44: #{tpu_custom_call.1} parent=39 // pred_fallthru
          _
        %s272 = sand.u32 %s24, 1
        %s273 = scalar_lea.sflag [#allocation6], %s272
        %s274 = sand.u32 %s53, 1
        %s275 = smul.addr %s274, 512
        %s276 = scalar_lea.vmem [#allocation5], %s275
        // Predicated region
        $region45: #{tpu_custom_call.1} parent=39 // pred_check
          %p277 = pneg %p66
        $region46: #{tpu_custom_call.1} parent=39 // pred_check_branch
          %279 = sbr.rel (%p277) target = $region48
        $region47: #{tpu_custom_call.1} parent=39 // pred_region
          %280 = dma.done %s273, 8192
        $region48: #{tpu_custom_call.1} parent=39 // pred_fallthru
          _
        %s281 = sand.u32 %s24, 1
        %s282 = scalar_lea.sflag [#allocation6], %s281
        %s283 = sand.u32 %s79, 1
        %s284 = smul.addr %s283, 2
        %s285 = scalar_lea.vmem [#allocation7], %s284
        // Predicated region
        $region49: #{tpu_custom_call.1} parent=39 // pred_check
          %p286 = pneg %p92
        $region50: #{tpu_custom_call.1} parent=39 // pred_check_branch
          %288 = sbr.rel (%p286) target = $region52
        $region51: #{tpu_custom_call.1} parent=39 // pred_region
          %289 = dma.done %s282, 32
        $region52: #{tpu_custom_call.1} parent=39 // pred_fallthru
          _
        %s290 = sand.u32 %s131, 1
        %s291 = scalar_lea.sflag [#allocation9], %s290
        %s292 = sand.u32 %s131, 1
        %s293 = smul.addr %s292, 2
        %s294 = scalar_lea.vmem [#allocation8], %s293
        // Predicated region
        $region53: #{tpu_custom_call.1} parent=39 // pred_check
          %p295 = pneg %p144
        $region54: #{tpu_custom_call.1} parent=39 // pred_check_branch
          %297 = sbr.rel (%p295) target = $region56
        $region55: #{tpu_custom_call.1} parent=39 // pred_region
          %298 = dma.done %s291, 32
        $region56: #{tpu_custom_call.1} parent=39 // pred_fallthru
          _
        %p299 = pneg %p40
        %p300 = pneg %p37
        %s301 = sand.u32 %s24, 1
        %s302 = scalar_lea.sflag [#allocation6], %s301
        %s303 = sand.u32 %s53, 1
        %s304 = smul.addr %s303, 512
        %s305 = scalar_lea.vmem [#allocation5], %s304
        %p306 = pneg %p66
        %p307 = pneg %p63
        %s308 = sand.u32 %s24, 1
        %s309 = scalar_lea.sflag [#allocation6], %s308
        %s310 = sand.u32 %s79, 1
        %s311 = smul.addr %s310, 2
        %s312 = scalar_lea.vmem [#allocation7], %s311
        %p313 = pneg %p92
        %p314 = pneg %p89
        %p315 = scmp.lt.s32.totalorder %s24, 3
        %s316 = scalar_select %p315, %s24, 3
        %s317 = smul.addr %s316, 2
        %s318 = scalar_lea.vmem %s3, %s317
        %p319 = pneg %p118
        %p320 = pneg %p115
        %s321 = sand.u32 %s131, 1
        %s322 = scalar_lea.sflag [#allocation9], %s321
        %s323 = sand.u32 %s131, 1
        %s324 = smul.addr %s323, 2
        %s325 = scalar_lea.vmem [#allocation8], %s324
        %p326 = pneg %p144
        %p327 = pneg %p141
        %p328 = pneg %p165
        %p329 = pneg %p162
        %p330 = scmp.lt.s32.totalorder %s24, 3
        %s331 = scalar_select %p330, %s24, 3
        %s332 = smul.addr %s331, 2
        %s333 = scalar_lea.vmem %s3, %s332
        %p334 = scmp.eq.s32.totalorder %s24, 0
        // Predicated region
        $region57: #{tpu_custom_call.1} parent=39 // pred_check
          %p335 = pneg %p334
        $region58: #{tpu_custom_call.1} parent=39 // pred_check_branch
          %337 = sbr.rel (%p335) target = $region60
        $region59: #{tpu_custom_call.1} parent=39 // pred_region
          %v338 = vld [vmem:[#allocation2] sm:$0xff]
          %v339 = vld [vmem:[#allocation2 + $0x8] sm:$0xff]
          %340 = vst [vmem:[#allocation10] sm:$0xff] %v338
          %341 = vst [vmem:[#allocation10 + $0x8] sm:$0xff] %v339
        $region60: #{tpu_custom_call.1} parent=39 // pred_fallthru
          _
        %v342 = vld [vmem:[#allocation10] sm:$0xff]
        %v343 = vld [vmem:[#allocation10 + $0x8] sm:$0xff]
        %v344 = vld [vmem:[%s276] sm:$0xff]
        %v345 = vld [vmem:[%s276 + $0x8] sm:$0xff]
        %v346 = vld [vmem:[%s276 + $0x10] sm:$0xff]
        %v347 = vld [vmem:[%s276 + $0x18] sm:$0xff]
        %v348 = vld [vmem:[%s276 + $0x20] sm:$0xff]
        %v349 = vld [vmem:[%s276 + $0x28] sm:$0xff]
        %v350 = vld [vmem:[%s276 + $0x30] sm:$0xff]
        %v351 = vld [vmem:[%s276 + $0x38] sm:$0xff]
        %v352 = vld [vmem:[%s276 + $0x40] sm:$0xff]
        %v353 = vld [vmem:[%s276 + $0x48] sm:$0xff]
        %v354 = vld [vmem:[%s276 + $0x50] sm:$0xff]
        %v355 = vld [vmem:[%s276 + $0x58] sm:$0xff]
        %v356 = vld [vmem:[%s276 + $0x60] sm:$0xff]
        %v357 = vld [vmem:[%s276 + $0x68] sm:$0xff]
        %v358 = vld [vmem:[%s276 + $0x70] sm:$0xff]
        %v359 = vld [vmem:[%s276 + $0x78] sm:$0xff]
        %v360 = vld [vmem:[%s276 + $0x80] sm:$0xff]
        %v361 = vld [vmem:[%s276 + $0x88] sm:$0xff]
        %v362 = vld [vmem:[%s276 + $0x90] sm:$0xff]
        %v363 = vld [vmem:[%s276 + $0x98] sm:$0xff]
        %v364 = vld [vmem:[%s276 + $0xa0] sm:$0xff]
        %v365 = vld [vmem:[%s276 + $0xa8] sm:$0xff]
        %v366 = vld [vmem:[%s276 + $0xb0] sm:$0xff]
        %v367 = vld [vmem:[%s276 + $0xb8] sm:$0xff]
        %v368 = vld [vmem:[%s276 + $0xc0] sm:$0xff]
        %v369 = vld [vmem:[%s276 + $0xc8] sm:$0xff]
        %v370 = vld [vmem:[%s276 + $0xd0] sm:$0xff]
        %v371 = vld [vmem:[%s276 + $0xd8] sm:$0xff]
        %v372 = vld [vmem:[%s276 + $0xe0] sm:$0xff]
        %v373 = vld [vmem:[%s276 + $0xe8] sm:$0xff]
        %v374 = vld [vmem:[%s276 + $0xf0] sm:$0xff]
        %v375 = vld [vmem:[%s276 + $0xf8] sm:$0xff]
        %v376 = vld [vmem:[%s276 + $0x100] sm:$0xff]
        %v377 = vld [vmem:[%s276 + $0x108] sm:$0xff]
        %v378 = vld [vmem:[%s276 + $0x110] sm:$0xff]
        %v379 = vld [vmem:[%s276 + $0x118] sm:$0xff]
        %v380 = vld [vmem:[%s276 + $0x120] sm:$0xff]
        %v381 = vld [vmem:[%s276 + $0x128] sm:$0xff]
        %v382 = vld [vmem:[%s276 + $0x130] sm:$0xff]
        %v383 = vld [vmem:[%s276 + $0x138] sm:$0xff]
        %v384 = vld [vmem:[%s276 + $0x140] sm:$0xff]
        %v385 = vld [vmem:[%s276 + $0x148] sm:$0xff]
        %v386 = vld [vmem:[%s276 + $0x150] sm:$0xff]
        %v387 = vld [vmem:[%s276 + $0x158] sm:$0xff]
        %v388 = vld [vmem:[%s276 + $0x160] sm:$0xff]
        %v389 = vld [vmem:[%s276 + $0x168] sm:$0xff]
        %v390 = vld [vmem:[%s276 + $0x170] sm:$0xff]
        %v391 = vld [vmem:[%s276 + $0x178] sm:$0xff]
        %v392 = vld [vmem:[%s276 + $0x180] sm:$0xff]
        %v393 = vld [vmem:[%s276 + $0x188] sm:$0xff]
        %v394 = vld [vmem:[%s276 + $0x190] sm:$0xff]
        %v395 = vld [vmem:[%s276 + $0x198] sm:$0xff]
        %v396 = vld [vmem:[%s276 + $0x1a0] sm:$0xff]
        %v397 = vld [vmem:[%s276 + $0x1a8] sm:$0xff]
        %v398 = vld [vmem:[%s276 + $0x1b0] sm:$0xff]
        %v399 = vld [vmem:[%s276 + $0x1b8] sm:$0xff]
        %v400 = vld [vmem:[%s276 + $0x1c0] sm:$0xff]
        %v401 = vld [vmem:[%s276 + $0x1c8] sm:$0xff]
        %v402 = vld [vmem:[%s276 + $0x1d0] sm:$0xff]
        %v403 = vld [vmem:[%s276 + $0x1d8] sm:$0xff]
        %v404 = vld [vmem:[%s276 + $0x1e0] sm:$0xff]
        %v405 = vld [vmem:[%s276 + $0x1e8] sm:$0xff]
        %v406 = vld [vmem:[%s276 + $0x1f0] sm:$0xff]
        %v407 = vld [vmem:[%s276 + $0x1f8] sm:$0xff]
        %v408 = vld [vmem:[%s285] sm:$0x3]
        %v410 = vlaneseq
        %v411 = vshrl.u32 %v410, 7
        %v412 = vsub.s32 0, %v411
        %v413 = vrot.slane %v408, %v412
        %v414 = vlaneseq
        %v415 = vshrl.u32 %v414, 7
        %v416 = vsub.s32 1, %v415
        %v417 = vrot.slane %v408, %v416
        %420 = vmatprep.subr.mxu0 %v345
        %421 = vmatpush1.msra.mxu0 %v344
        %422 = vmatprep.subr.mxu0 %v347
        %423 = vmatpush1.msra.mxu0 %v346
        %424 = vmatprep.subr.mxu0 %v349
        %425 = vmatpush1.msra.mxu0 %v348
        %426 = vmatprep.subr.mxu0 %v351
        %427 = vmatpush1.msra.mxu0 %v350
        %428 = vmatprep.subr.mxu0 %v353
        %429 = vmatpush1.msra.mxu0 %v352
        %430 = vmatprep.subr.mxu0 %v355
        %431 = vmatpush1.msra.mxu0 %v354
        %432 = vmatprep.subr.mxu0 %v357
        %433 = vmatpush1.msra.mxu0 %v356
        %434 = vmatprep.subr.mxu0 %v359
        %435 = vmatpush1.msra.mxu0 %v358
        %436 = vmatprep.subr.mxu0 %v361
        %437 = vmatpush1.msra.mxu0 %v360
        %438 = vmatprep.subr.mxu0 %v363
        %439 = vmatpush1.msra.mxu0 %v362
        %440 = vmatprep.subr.mxu0 %v365
        %441 = vmatpush1.msra.mxu0 %v364
        %442 = vmatprep.subr.mxu0 %v367
        %443 = vmatpush1.msra.mxu0 %v366
        %444 = vmatprep.subr.mxu0 %v369
        %445 = vmatpush1.msra.mxu0 %v368
        %446 = vmatprep.subr.mxu0 %v371
        %447 = vmatpush1.msra.mxu0 %v370
        %448 = vmatprep.subr.mxu0 %v373
        %449 = vmatpush1.msra.mxu0 %v372
        %450 = vmatprep.subr.mxu0 %v375
        %451 = vmatpush1.msra.mxu0 %v374
        %452 = vmatprep.subr.mxu0 %v377
        %453 = vmatpush1.msra.mxu0 %v376
        %454 = vmatprep.subr.mxu0 %v379
        %455 = vmatpush1.msra.mxu0 %v378
        %456 = vmatprep.subr.mxu0 %v381
        %457 = vmatpush1.msra.mxu0 %v380
        %458 = vmatprep.subr.mxu0 %v383
        %459 = vmatpush1.msra.mxu0 %v382
        %460 = vmatprep.subr.mxu0 %v385
        %461 = vmatpush1.msra.mxu0 %v384
        %462 = vmatprep.subr.mxu0 %v387
        %463 = vmatpush1.msra.mxu0 %v386
        %464 = vmatprep.subr.mxu0 %v389
        %465 = vmatpush1.msra.mxu0 %v388
        %466 = vmatprep.subr.mxu0 %v391
        %467 = vmatpush1.msra.mxu0 %v390
        %468 = vmatprep.subr.mxu0 %v393
        %469 = vmatpush1.msra.mxu0 %v392
        %470 = vmatprep.subr.mxu0 %v395
        %471 = vmatpush1.msra.mxu0 %v394
        %472 = vmatprep.subr.mxu0 %v397
        %473 = vmatpush1.msra.mxu0 %v396
        %474 = vmatprep.subr.mxu0 %v399
        %475 = vmatpush1.msra.mxu0 %v398
        %476 = vmatprep.subr.mxu0 %v401
        %477 = vmatpush1.msra.mxu0 %v400
        %478 = vmatprep.subr.mxu0 %v403
        %479 = vmatpush1.msra.mxu0 %v402
        %480 = vmatprep.subr.mxu0 %v405
        %481 = vmatpush1.msra.mxu0 %v404
        %482 = vmatprep.subr.mxu0 %v407
        %483 = vmatpush1.msra.mxu0 %v406
        %484 = vmatprep.mubr.f32.mxu0 %v343
        %485 = vmatmul.mubr.f32.gmra.mrb[0].mxu0 %v342
        %v486 = vpop.f32.mrb[0].mxu0
        %v487 = vadd.f32 %v413, %v486
        %v488 = vpop.f32.mrb[0].mxu0
        %v489 = vadd.f32 %v417, %v488
        %490 = vdwg.mxu0
        %v491 = vrot.slane %v487, 4
        %v492 = vadd.f32 %v487, %v491
        %v493 = vrot.slane %v492, 2
        %v494 = vadd.f32 %v492, %v493
        %v495 = vrot.slane %v494, 1
        %v496 = vadd.f32 %v494, %v495
        %v497 = vrot.slane %v489, 4
        %v498 = vadd.f32 %v489, %v497
        %v499 = vrot.slane %v498, 2
        %v500 = vadd.f32 %v498, %v499
        %v501 = vrot.slane %v500, 1
        %v502 = vadd.f32 %v500, %v501
        %v503 = vrcp.pop 8.0
        %v504 = vmul.f32 %v496, %v503
        %v505 = vmul.f32 %v502, %v503
        %v506 = vsub.f32 %v487, %v504
        %v507 = vsub.f32 %v489, %v505
        %v508 = vmul.f32 %v506, %v506
        %v509 = vmul.f32 %v507, %v507
        %v510 = vrot.slane %v508, 4
        %v511 = vadd.f32 %v508, %v510
        %v512 = vrot.slane %v511, 2
        %v513 = vadd.f32 %v511, %v512
        %v514 = vrot.slane %v513, 1
        %v515 = vadd.f32 %v513, %v514
        %v516 = vrot.slane %v509, 4
        %v517 = vadd.f32 %v509, %v516
        %v518 = vrot.slane %v517, 2
        %v519 = vadd.f32 %v517, %v518
        %v520 = vrot.slane %v519, 1
        %v521 = vadd.f32 %v519, %v520
        %v522 = vmul.f32 %v515, %v503
        %v523 = vmul.f32 %v521, %v503
        %v524 = vadd.f32 %v522, 1e-05
        %v525 = vadd.f32 %v523, 1e-05
        %v526 = vrsqrt.pop %v524
        %v527 = vrsqrt.pop %v525
        %v528 = vmul.f32 %v506, %v526
        %v529 = vmul.f32 %v507, %v527
        %v530 = vld [vmem:[%s333] sm:$0x3]
        %v532 = vlaneseq
        %v533 = vshrl.u32 %v532, 7
        %v534 = vsub.s32 0, %v533
        %v535 = vrot.slane %v530, %v534
        %v536 = vlaneseq
        %v537 = vshrl.u32 %v536, 7
        %v538 = vsub.s32 1, %v537
        %v539 = vrot.slane %v530, %v538
        %v542 = vmul.f32 %v528, %v535
        %v543 = vmul.f32 %v529, %v539
        %v544 = vld [vmem:[%s294] sm:$0x3]
        %v546 = vlaneseq
        %v547 = vshrl.u32 %v546, 7
        %v548 = vsub.s32 0, %v547
        %v549 = vrot.slane %v544, %v548
        %v550 = vlaneseq
        %v551 = vshrl.u32 %v550, 7
        %v552 = vsub.s32 1, %v551
        %v553 = vrot.slane %v544, %v552
        %v556 = vadd.f32 %v542, %v549
        %v557 = vadd.f32 %v543, %v553
        %v558 = vmax.f32 %v556, 0.0
        %v559 = vmax.f32 %v557, 0.0
        %v560 = vadd.f32 %v342, %v558
        %v561 = vadd.f32 %v343, %v559
        %562 = vst [vmem:[#allocation10] sm:$0xff] %v560
        %563 = vst [vmem:[#allocation10 + $0x8] sm:$0xff] %v561
        // Predicated region
        $region61: #{tpu_custom_call.1} parent=39 // pred_check
          %p564 = pneg %p162
        $region62: #{tpu_custom_call.1} parent=39 // pred_check_branch
          %566 = sbr.rel (%p564) target = $region64
        $region63: #{tpu_custom_call.1} parent=39 // pred_region
          %s568 = ssub.s32 256, 256
          %569 = vsyncadd [#allocation4], %s568
          %s571 = sshll.u32 [#allocation10], 4
          %s572 = int_to_ptr.vmem [resolvable:$true] %s571
          %574 = dma.vmem_to_hbm [thread:$0]  %s572, 256, %s5, [#allocation4]
        $region64: #{tpu_custom_call.1} parent=39 // pred_fallthru
          _
        // Predicated region
        $region65: #{tpu_custom_call.1} parent=39 // pred_check
          %p575 = pneg %p162
        $region66: #{tpu_custom_call.1} parent=39 // pred_check_branch
          %577 = sbr.rel (%p575) target = $region68
        $region67: #{tpu_custom_call.1} parent=39 // pred_region
          %578 = dma.done [#allocation4], 256
        $region68: #{tpu_custom_call.1} parent=39 // pred_fallthru
          _
      $region40: #{tpu_custom_call.1} parent=5 // pred_fallthru
        _
      %p579 = scmp.le.s32.totalorder 2, %s19
      // Predicated region
      $region69: #{tpu_custom_call.1} parent=5 // pred_check
        %p580 = pneg %p579
      $region70: #{tpu_custom_call.1} parent=5 // pred_check_branch
        %582 = sbr.rel (%p580) target = $region72
      $region71: #{tpu_custom_call.1} parent=5 // pred_region
        %s583 = ssub.s32 %s19, 2
      $region72: #{tpu_custom_call.1} parent=5 // pred_fallthru
        _
    $region6: #{tpu_custom_call.1} parent=1 // loop_footer
      %s23 = sadd.s32 1, %s19
    $region7: #{tpu_custom_call.1} parent=1 // loop_footer_branch
      %18 = sbr.rel target = $region3
    $region8: #{tpu_custom_call.1} parent=1 // loop_exit
      _
    %584 = vsyncpa [#allocation3], 1
    %s585 = scalar_lea.sflag [#allocation3], 1
    %586 = vsyncpa %s585, 1
    %587 = vsyncpa [#allocation6], 1
    %s588 = scalar_lea.sflag [#allocation6], 1
    %589 = vsyncpa %s588, 1
    %590 = vsyncpa [#allocation9], 1
    %s591 = scalar_lea.sflag [#allocation9], 1
    %592 = vsyncpa %s591, 1
    %593 = vsyncpa [#allocation4], 1
    %s594 = scalar_lea.sflag [#allocation4], 1
    %595 = vsyncpa %s594, 1

</llo_original>
